<compile_context>
chip_gen: v5e
topology: v5e:2x2
jax: 0.10.0
libtpu: 0.0.40
codegen_flags: <defaults>
</compile_context>

<pallas_src>
import functools

import jax
import jax.numpy as jnp
from jax import lax
from jax.experimental import pallas as pl
from jax.experimental.pallas import tpu as pltpu

LANE = 128
SUBLANE = 8


def _round_up(x, m):
    return (x + m - 1) // m * m


def _is_packed(fc2_dims, n_actions):
    """Packed mode: latent + A lanes + V lane all fit inside one 128-lane tile."""
    return (fc2_dims + n_actions + 1) <= LANE


def _choose_tile_b(batch):
    """Sublane-aligned batch tile.

    Big tiles (up to 512 rows) amortize per-grid-step overhead; once batch
    exceeds one tile we force >= 2 grid steps so v7x's two TensorCores both
    get work (the batch axis is marked "parallel")."""
    b_pad = _round_up(batch, SUBLANE)
    if b_pad <= 128:
        return b_pad                     # tiny batch: single grid step
    return min(512, _round_up((batch + 1) // 2, SUBLANE))


def _dueling_kernel(x_ref, w1_ref, b1_ref, w2_ref, b2_ref, w3_ref, b3_ref,
                    wh_ref, bh_ref, out_ref, *, n_actions, fc2_dims, packed):
    x = x_ref[...]

    h = jnp.dot(x, w1_ref[...], preferred_element_type=jnp.float32) + b1_ref[...]
    h = jnp.maximum(h, 0.0)
    h = jnp.dot(h, w2_ref[...], preferred_element_type=jnp.float32) + b2_ref[...]
    h = jnp.maximum(h, 0.0)
    h = jnp.dot(h, w3_ref[...], preferred_element_type=jnp.float32) + b3_ref[...]
    h = jnp.maximum(h, 0.0)                       # == latent (pad lanes are exact 0)

    # Fused dueling head.  In packed mode A/V were shifted to lanes
    # [fc2_dims, fc2_dims + n_actions] at prep time; all other lanes are 0.
    head = jnp.dot(h, wh_ref[...], preferred_element_type=jnp.float32) + bh_ref[...]

    v_col = (fc2_dims + n_actions) if packed else n_actions
    v = head[:, v_col:v_col + 1]                  # (tile_b, 1)
    # Lane-dense reduce over the whole padded row; pad lanes contribute 0,
    # so  sum(head) = sum(A) + V  ->  mean(A) = (sum(head) - V) / n_actions.
    total = jnp.sum(head, axis=1, keepdims=True)
    mean_a = (total - v) * (1.0 / float(n_actions))
    q = head + (v - mean_a)                       # == V + (A - mean(A)) on A lanes

    if packed:
        # Merge Q into the zero pad lanes of the latent block: one dense store.
        lane = lax.broadcasted_iota(jnp.int32, head.shape, 1)
        is_q = (lane >= fc2_dims) & (lane < fc2_dims + n_actions)
        out_ref[...] = jnp.where(is_q, q, h).astype(out_ref.dtype)
    else:
        # Two direct stores; both slice starts are 128-lane aligned (dense vst).
        f2_p = h.shape[1]
        out_ref[:, :f2_p] = h.astype(out_ref.dtype)
        out_ref[:, f2_p:] = q.astype(out_ref.dtype)


def init_params(key, input_dims, fc1_dims, fc2_dims, n_actions):
    """PyTorch-nn.Linear-style uniform init (logical, unpadded shapes).

    Weights stored as (in_features, out_features) [W.T vs torch]; biases (1, out)."""
    def linear(k, fan_in, fan_out):
        kw, kb = jax.random.split(k)
        bound = 1.0 / jnp.sqrt(float(fan_in))
        w = jax.random.uniform(kw, (fan_in, fan_out), jnp.float32, -bound, bound)
        b = jax.random.uniform(kb, (1, fan_out), jnp.float32, -bound, bound)
        return w, b

    k1, k2, k3, ka, kv = jax.random.split(key, 5)
    w1, b1 = linear(k1, input_dims, fc1_dims)
    w2, b2 = linear(k2, fc1_dims, fc2_dims)
    w3, b3 = linear(k3, fc2_dims, fc2_dims)
    wa, ba = linear(ka, fc2_dims, n_actions)
    wv, bv = linear(kv, fc2_dims, 1)
    return (w1, b1, w2, b2, w3, b3, wa, ba, wv, bv)


def prepare_params(params, input_dims, fc1_dims, fc2_dims, n_actions):
    """Fuse the A/V heads, zero-pad every feature dim to the 128-lane width,
    and (in packed mode) shift the head columns into the latent pad lanes."""
    (w1, b1, w2, b2, w3, b3, wa, ba, wv, bv) = params
    in_p = _round_up(input_dims, LANE)
    f1_p = _round_up(fc1_dims, LANE)
    f2_p = _round_up(fc2_dims, LANE)
    packed = _is_packed(fc2_dims, n_actions)

    def pad2(a, rows, cols, col_off=0):
        return jnp.pad(a, ((0, rows - a.shape[0]),
                           (col_off, cols - a.shape[1] - col_off)))

    wh = jnp.concatenate([wa, wv], axis=1)        # (fc2, n_actions + 1)
    bh = jnp.concatenate([ba, bv], axis=1)        # (1,   n_actions + 1)

    if packed:
        head_cols = f2_p                          # A/V live inside the latent block
        col_off = fc2_dims
    else:
        head_cols = _round_up(n_actions + 1, LANE)
        col_off = 0

    # NOTE: stored as f32; switch to bf16 (with f32 accumulation in the kernel)
    # once fc widths / batch scale up -- halves weight DMA and resident VMEM.
    return (
        pad2(w1, in_p, f1_p), pad2(b1, 1, f1_p),
        pad2(w2, f1_p, f2_p), pad2(b2, 1, f2_p),
        pad2(w3, f2_p, f2_p), pad2(b3, 1, f2_p),
        pad2(wh, f2_p, head_cols, col_off), pad2(bh, 1, head_cols, col_off),
    )


@functools.partial(jax.jit, static_argnames=("fc2_dims", "n_actions"))
def dueling_dqn_apply(x, padded_params, *, fc2_dims, n_actions):
    """Returns (latent, q): latent == DuelingDQN.forward, q == predict_grad."""
    (w1p, b1p, w2p, b2p, w3p, b3p, whp, bhp) = padded_params
    batch, in_dims = x.shape
    in_p = w1p.shape[0]
    f1_p = w1p.shape[1]
    f2_p = w3p.shape[1]
    head_cols = whp.shape[1]
    packed = _is_packed(fc2_dims, n_actions)
    out_cols = f2_p if packed else f2_p + head_cols

    tile_b = _choose_tile_b(batch)
    batch_p = _round_up(batch, tile_b)
    grid = (batch_p // tile_b,)

    # Zero-pad batch rows + input feature lanes in the wrapper (outside kernel).
    x_p = jnp.pad(x, ((0, batch_p - batch), (0, in_p - in_dims)))

    kernel = functools.partial(_dueling_kernel, n_actions=n_actions,
                               fc2_dims=fc2_dims, packed=packed)

    const = lambda i: (0, 0)  # weights/biases: resident across all batch tiles
    in_specs = [
        pl.BlockSpec((tile_b, in_p), lambda i: (i, 0)),   # x tile (streams)
        pl.BlockSpec((in_p, f1_p), const),
        pl.BlockSpec((1, f1_p), const),
        pl.BlockSpec((f1_p, f2_p), const),
        pl.BlockSpec((1, f2_p), const),
        pl.BlockSpec((f2_p, f2_p), const),
        pl.BlockSpec((1, f2_p), const),
        pl.BlockSpec((f2_p, head_cols), const),
        pl.BlockSpec((1, head_cols), const),
    ]
    out_spec = pl.BlockSpec((tile_b, out_cols), lambda i: (i, 0))

    # VMEM budget: resident params (assume worst-case double buffered) plus
    # double-buffered streaming x / output tiles.  Only raise the scoped limit
    # when it would not fit the conservative 16 MiB default (v5e first).
    param_bytes = sum(int(p.size) * p.dtype.itemsize for p in padded_params)
    stream_bytes = (tile_b * in_p + tile_b * out_cols) * 4 * 2
    est = 2 * param_bytes + stream_bytes
    vmem_limit = None
    if est > 16 * 1024 * 1024:
        vmem_limit = min(int(est * 1.25), 60 * 1024 * 1024)  # stay under v7x 64 MiB

    slab = pl.pallas_call(
        kernel,
        out_shape=jax.ShapeDtypeStruct((batch_p, out_cols), jnp.float32),
        grid=grid,
        in_specs=in_specs,
        out_specs=out_spec,
        compiler_params=pltpu.CompilerParams(
            dimension_semantics=("parallel",),   # v7x: shard batch tiles across TCs
            vmem_limit_bytes=vmem_limit,
        ),
    )(x_p, w1p, b1p, w2p, b2p, w3p, b3p, whp, bhp)

    latent = slab[:batch, :fc2_dims]
    if packed:
        q = slab[:batch, fc2_dims:fc2_dims + n_actions]
    else:
        q = slab[:batch, f2_p:f2_p + n_actions]
    return latent, q


def _reference(x, params):
    """Pure-JAX reference (matches the PyTorch module)."""
    (w1, b1, w2, b2, w3, b3, wa, ba, wv, bv) = params
    h = jnp.maximum(x @ w1 + b1, 0.0)
    h = jnp.maximum(h @ w2 + b2, 0.0)
    h = jnp.maximum(h @ w3 + b3, 0.0)
    a = h @ wa + ba
    v = h @ wv + bv
    q = v + (a - a.mean(axis=1, keepdims=True))
    return h, q


def _run_case(key, batch, input_dims, fc1_dims, fc2_dims, n_actions):
    kx, kp = jax.random.split(key)
    x = jax.random.normal(kx, (batch, input_dims), jnp.float32)
    params = init_params(kp, input_dims, fc1_dims, fc2_dims, n_actions)
    padded = prepare_params(params, input_dims, fc1_dims, fc2_dims, n_actions)

    latent, q = dueling_dqn_apply(x, padded, fc2_dims=fc2_dims, n_actions=n_actions)
    jax.block_until_ready((latent, q))

    ref_latent, ref_q = _reference(x, params)
    assert latent.shape == ref_latent.shape and q.shape == ref_q.shape
    assert jnp.allclose(latent, ref_latent, atol=1e-5, rtol=1e-5)
    assert jnp.allclose(q, ref_q, atol=1e-5, rtol=1e-5)


# TODO(synk): the optimizer / MSE loss / fit() target construction are host-side
# training logic (Adam, numpy indexing) and are not part of this forward kernel.

if __name__ == "__main__":
    key = jax.random.PRNGKey(0)
    k1, k2 = jax.random.split(key)

    # Case 1: toy sizes from the spec (packed single-block output path,
    # single small batch tile).
    _run_case(k1, batch=8, input_dims=16, fc1_dims=32, fc2_dims=32, n_actions=4)

    # Case 2: larger config exercising the two-store slab path and the
    # multi-step (>=2 grid steps) batch tiling.
    _run_case(k2, batch=300, input_dims=24, fc1_dims=48, fc2_dims=160, n_actions=6)

    print("KERNEL_OK")
</pallas_src>

<mosaic_0001>
module attributes {stable_mosaic.version = 11 : i64} {
  func.func @_dueling_kernel(%arg0: i32, %arg1: memref<8x128xf32, #tpu.memory_space<vmem>>, %arg2: memref<128x128xf32, #tpu.memory_space<vmem>>, %arg3: memref<1x128xf32, #tpu.memory_space<vmem>>, %arg4: memref<128x128xf32, #tpu.memory_space<vmem>>, %arg5: memref<1x128xf32, #tpu.memory_space<vmem>>, %arg6: memref<128x128xf32, #tpu.memory_space<vmem>>, %arg7: memref<1x128xf32, #tpu.memory_space<vmem>>, %arg8: memref<128x128xf32, #tpu.memory_space<vmem>>, %arg9: memref<1x128xf32, #tpu.memory_space<vmem>>, %arg10: memref<8x128xf32, #tpu.memory_space<vmem>>) attributes {dimension_semantics = [#tpu.dimension_semantics<parallel>], iteration_bounds = array<i64: 1>, scalar_prefetch = 0 : i64, scratch_operands = 0 : i64, tpu.core_type = #tpu.core_type<tc>, window_params = [{transform_indices = @transform_0, window_bounds = array<i64: 8, 128>}, {pipeline_mode = #tpu.pipeline_mode<synchronous>, transform_indices = @transform_1, window_bounds = array<i64: 128, 128>}, {pipeline_mode = #tpu.pipeline_mode<synchronous>, transform_indices = @transform_2, window_bounds = array<i64: 1, 128>}, {pipeline_mode = #tpu.pipeline_mode<synchronous>, transform_indices = @transform_3, window_bounds = array<i64: 128, 128>}, {pipeline_mode = #tpu.pipeline_mode<synchronous>, transform_indices = @transform_4, window_bounds = array<i64: 1, 128>}, {pipeline_mode = #tpu.pipeline_mode<synchronous>, transform_indices = @transform_5, window_bounds = array<i64: 128, 128>}, {pipeline_mode = #tpu.pipeline_mode<synchronous>, transform_indices = @transform_6, window_bounds = array<i64: 1, 128>}, {pipeline_mode = #tpu.pipeline_mode<synchronous>, transform_indices = @transform_7, window_bounds = array<i64: 128, 128>}, {pipeline_mode = #tpu.pipeline_mode<synchronous>, transform_indices = @transform_8, window_bounds = array<i64: 1, 128>}, {transform_indices = @transform_9, window_bounds = array<i64: 8, 128>}]} {
    %c0 = arith.constant 0 : index
    %c0_0 = arith.constant 0 : index
    %0 = vector.load %arg1[%c0, %c0_0] : memref<8x128xf32, #tpu.memory_space<vmem>>, vector<8x128xf32>
    %c0_1 = arith.constant 0 : index
    %c0_2 = arith.constant 0 : index
    %1 = vector.load %arg2[%c0_1, %c0_2] : memref<128x128xf32, #tpu.memory_space<vmem>>, vector<128x128xf32>
    %cst = arith.constant dense<0.000000e+00> : vector<8x128xf32>
    %2 = tpu.matmul %0, %1, %cst {dimension_numbers = #tpu.dot_dimension_numbers<[1], [0], [0], [1], [0, 0, 1, 1], [], []>} : vector<8x128xf32>, vector<128x128xf32>, vector<8x128xf32> -> vector<8x128xf32>
    %c0_3 = arith.constant 0 : index
    %c0_4 = arith.constant 0 : index
    %3 = vector.load %arg3[%c0_3, %c0_4] : memref<1x128xf32, #tpu.memory_space<vmem>>, vector<1x128xf32>
    %4 = vector.broadcast %3 : vector<1x128xf32> to vector<8x128xf32>
    %5 = arith.addf %2, %4 : vector<8x128xf32>
    %cst_5 = arith.constant 0.000000e+00 : f32
    %6 = vector.broadcast %cst_5 : f32 to vector<8x128xf32>
    %7 = arith.maximumf %5, %6 : vector<8x128xf32>
    %c0_6 = arith.constant 0 : index
    %c0_7 = arith.constant 0 : index
    %8 = vector.load %arg4[%c0_6, %c0_7] : memref<128x128xf32, #tpu.memory_space<vmem>>, vector<128x128xf32>
    %cst_8 = arith.constant dense<0.000000e+00> : vector<8x128xf32>
    %9 = tpu.matmul %7, %8, %cst_8 {dimension_numbers = #tpu.dot_dimension_numbers<[1], [0], [0], [1], [0, 0, 1, 1], [], []>} : vector<8x128xf32>, vector<128x128xf32>, vector<8x128xf32> -> vector<8x128xf32>
    %c0_9 = arith.constant 0 : index
    %c0_10 = arith.constant 0 : index
    %10 = vector.load %arg5[%c0_9, %c0_10] : memref<1x128xf32, #tpu.memory_space<vmem>>, vector<1x128xf32>
    %11 = vector.broadcast %10 : vector<1x128xf32> to vector<8x128xf32>
    %12 = arith.addf %9, %11 : vector<8x128xf32>
    %cst_11 = arith.constant 0.000000e+00 : f32
    %13 = vector.broadcast %cst_11 : f32 to vector<8x128xf32>
    %14 = arith.maximumf %12, %13 : vector<8x128xf32>
    %c0_12 = arith.constant 0 : index
    %c0_13 = arith.constant 0 : index
    %15 = vector.load %arg6[%c0_12, %c0_13] : memref<128x128xf32, #tpu.memory_space<vmem>>, vector<128x128xf32>
    %cst_14 = arith.constant dense<0.000000e+00> : vector<8x128xf32>
    %16 = tpu.matmul %14, %15, %cst_14 {dimension_numbers = #tpu.dot_dimension_numbers<[1], [0], [0], [1], [0, 0, 1, 1], [], []>} : vector<8x128xf32>, vector<128x128xf32>, vector<8x128xf32> -> vector<8x128xf32>
    %c0_15 = arith.constant 0 : index
    %c0_16 = arith.constant 0 : index
    %17 = vector.load %arg7[%c0_15, %c0_16] : memref<1x128xf32, #tpu.memory_space<vmem>>, vector<1x128xf32>
    %18 = vector.broadcast %17 : vector<1x128xf32> to vector<8x128xf32>
    %19 = arith.addf %16, %18 : vector<8x128xf32>
    %cst_17 = arith.constant 0.000000e+00 : f32
    %20 = vector.broadcast %cst_17 : f32 to vector<8x128xf32>
    %21 = arith.maximumf %19, %20 : vector<8x128xf32>
    %c0_18 = arith.constant 0 : index
    %c0_19 = arith.constant 0 : index
    %22 = vector.load %arg8[%c0_18, %c0_19] : memref<128x128xf32, #tpu.memory_space<vmem>>, vector<128x128xf32>
    %cst_20 = arith.constant dense<0.000000e+00> : vector<8x128xf32>
    %23 = tpu.matmul %21, %22, %cst_20 {dimension_numbers = #tpu.dot_dimension_numbers<[1], [0], [0], [1], [0, 0, 1, 1], [], []>} : vector<8x128xf32>, vector<128x128xf32>, vector<8x128xf32> -> vector<8x128xf32>
    %c0_21 = arith.constant 0 : index
    %c0_22 = arith.constant 0 : index
    %24 = vector.load %arg9[%c0_21, %c0_22] : memref<1x128xf32, #tpu.memory_space<vmem>>, vector<1x128xf32>
    %25 = vector.broadcast %24 : vector<1x128xf32> to vector<8x128xf32>
    %26 = arith.addf %23, %25 : vector<8x128xf32>
    %27 = vector.extract_strided_slice %26 {offsets = [0, 36], sizes = [8, 1], strides = [1, 1]} : vector<8x128xf32> to vector<8x1xf32>
    %cst_23 = arith.constant dense<0.000000e+00> : vector<8xf32>
    %28 = vector.multi_reduction <add>, %26, %cst_23 [1] : vector<8x128xf32> to vector<8xf32>
    %29 = vector.shape_cast %28 : vector<8xf32> to vector<8x1xf32>
    %30 = arith.subf %29, %27 : vector<8x1xf32>
    %cst_24 = arith.constant 2.500000e-01 : f32
    %31 = vector.broadcast %cst_24 : f32 to vector<8x1xf32>
    %32 = arith.mulf %30, %31 : vector<8x1xf32>
    %33 = arith.subf %27, %32 : vector<8x1xf32>
    %34 = vector.broadcast %33 : vector<8x1xf32> to vector<8x128xf32>
    %35 = arith.addf %26, %34 : vector<8x128xf32>
    %36 = tpu.iota {dimensions = array<i32: 1>} : vector<8x128xi32>
    %c32_i32 = arith.constant 32 : i32
    %37 = vector.broadcast %c32_i32 : i32 to vector<8x128xi32>
    %38 = arith.cmpi sge, %36, %37 : vector<8x128xi32>
    %c36_i32 = arith.constant 36 : i32
    %39 = vector.broadcast %c36_i32 : i32 to vector<8x128xi32>
    %40 = arith.cmpi slt, %36, %39 : vector<8x128xi32>
    %41 = arith.andi %38, %40 : vector<8x128xi1>
    %42 = arith.select %41, %35, %21 : vector<8x128xi1>, vector<8x128xf32>
    %c0_25 = arith.constant 0 : index
    %c0_26 = arith.constant 0 : index
    %43 = vector.load %arg10[%c0_25, %c0_26] : memref<8x128xf32, #tpu.memory_space<vmem>>, vector<8x128xf32>
    tpu.vector_store %arg10[%c0_25, %c0_26], %42 {strides = array<i32>} : memref<8x128xf32, #tpu.memory_space<vmem>>, vector<8x128xf32>,
    return
  }
  func.func @transform_0(%arg0: i32) -> (i32, i32) {
    %c0_i32 = arith.constant 0 : i32
    %c0_i32_0 = arith.constant 0 : i32
    return %arg0, %c0_i32 : i32, i32
  }
  func.func @transform_1(%arg0: i32) -> (i32, i32) {
    %c0_i32 = arith.constant 0 : i32
    %c0_i32_0 = arith.constant 0 : i32
    %c0_i32_1 = arith.constant 0 : i32
    return %c0_i32, %c0_i32_0 : i32, i32
  }
  func.func @transform_2(%arg0: i32) -> (i32, i32) {
    %c0_i32 = arith.constant 0 : i32
    %c0_i32_0 = arith.constant 0 : i32
    %c0_i32_1 = arith.constant 0 : i32
    return %c0_i32, %c0_i32_0 : i32, i32
  }
  func.func @transform_3(%arg0: i32) -> (i32, i32) {
    %c0_i32 = arith.constant 0 : i32
    %c0_i32_0 = arith.constant 0 : i32
    %c0_i32_1 = arith.constant 0 : i32
    return %c0_i32, %c0_i32_0 : i32, i32
  }
  func.func @transform_4(%arg0: i32) -> (i32, i32) {
    %c0_i32 = arith.constant 0 : i32
    %c0_i32_0 = arith.constant 0 : i32
    %c0_i32_1 = arith.constant 0 : i32
    return %c0_i32, %c0_i32_0 : i32, i32
  }
  func.func @transform_5(%arg0: i32) -> (i32, i32) {
    %c0_i32 = arith.constant 0 : i32
    %c0_i32_0 = arith.constant 0 : i32
    %c0_i32_1 = arith.constant 0 : i32
    return %c0_i32, %c0_i32_0 : i32, i32
  }
  func.func @transform_6(%arg0: i32) -> (i32, i32) {
    %c0_i32 = arith.constant 0 : i32
    %c0_i32_0 = arith.constant 0 : i32
    %c0_i32_1 = arith.constant 0 : i32
    return %c0_i32, %c0_i32_0 : i32, i32
  }
  func.func @transform_7(%arg0: i32) -> (i32, i32) {
    %c0_i32 = arith.constant 0 : i32
    %c0_i32_0 = arith.constant 0 : i32
    %c0_i32_1 = arith.constant 0 : i32
    return %c0_i32, %c0_i32_0 : i32, i32
  }
  func.func @transform_8(%arg0: i32) -> (i32, i32) {
    %c0_i32 = arith.constant 0 : i32
    %c0_i32_0 = arith.constant 0 : i32
    %c0_i32_1 = arith.constant 0 : i32
    return %c0_i32, %c0_i32_0 : i32, i32
  }
  func.func @transform_9(%arg0: i32) -> (i32, i32) {
    %c0_i32 = arith.constant 0 : i32
    %c0_i32_0 = arith.constant 0 : i32
    return %arg0, %c0_i32 : i32, i32
  }
}

</mosaic_0001>

<llo_original>
// kernel: dueling_dqn_apply.1
$region0: #{dueling_dqn_apply.1}
  #allocation0 [shape = 'u32[]', space=smem, size = 0x4, offset = 0x4, fixed_abs, tag = 'smem constant byte address 0x4 - core index']
  #allocation1 [shape = 'u32[72,128]{1,0:T(1,128)}', space=vmem, size = 0x9000, scoped, tag = 'internal scratch']
  %s0 = inlined_call_operand.vmem [shape: f32[8,128], index: 0, kind: input, shape index: {}]
  %s1 = inlined_call_operand.hbm [shape: f32[128,128], index: 1, kind: input, shape index: {}]
  %s2 = inlined_call_operand.vmem [shape: f32[1,128], index: 2, kind: input, shape index: {}]
  %s3 = inlined_call_operand.hbm [shape: f32[128,128], index: 3, kind: input, shape index: {}]
  %s4 = inlined_call_operand.vmem [shape: f32[1,128], index: 4, kind: input, shape index: {}]
  %s5 = inlined_call_operand.hbm [shape: f32[128,128], index: 5, kind: input, shape index: {}]
  %s6 = inlined_call_operand.vmem [shape: f32[1,128], index: 6, kind: input, shape index: {}]
  %s7 = inlined_call_operand.hbm [shape: f32[128,128], index: 7, kind: input, shape index: {}]
  %s8 = inlined_call_operand.vmem [shape: f32[1,128], index: 8, kind: input, shape index: {}]
  %s9 = inlined_call_operand.vmem [shape: f32[8,128], index: 9, kind: output, shape index: {}]
  %s10 = sld [smem:[#allocation0]]
  $region62: #{dueling_dqn_apply.1} parent=0
    _
  %s12 = ssub.s32 1, %s10
  %s13 = scalar_select 0, %s12, %s10
  $region1: #{dueling_dqn_apply.1} parent=0
    #allocation2 [shape = 'u8[65536]{0}', space=vmem, size = 0x10000, scoped, tag = 'input window, operand 1, single buffered']
    #allocation3 [shape = 's32[1]{0}', space=sflag, size = 0x4, scoped, tag = 'scoped memory for dueling_dqn_apply.1']
    #allocation4 [shape = 'u8[65536]{0}', space=vmem, size = 0x10000, scoped, tag = 'input window, operand 3, single buffered']
    #allocation5 [shape = 's32[1]{0}', space=sflag, size = 0x4, scoped, tag = 'scoped memory for dueling_dqn_apply.1']
    #allocation6 [shape = 'u8[65536]{0}', space=vmem, size = 0x10000, scoped, tag = 'input window, operand 5, single buffered']
    #allocation7 [shape = 'u8[65536]{0}', space=vmem, size = 0x10000, scoped, tag = 'input window, operand 7, single buffered']
    #allocation8 [shape = 's32[1]{0}', space=sflag, size = 0x4, scoped, tag = 'scoped memory for dueling_dqn_apply.1']
    %14 = vsyncpa [#allocation3], 0
    %15 = vsyncpa [#allocation5], 0
    %16 = vsyncpa [#allocation8], 0
    // Predicated region
    $region2: #{dueling_dqn_apply.1} parent=1 // pred_check
      _
    $region3: #{dueling_dqn_apply.1} parent=1 // pred_check_branch
      %18 = sbr.rel (0) target = $region5
    $region4: #{dueling_dqn_apply.1} parent=1 // pred_region
      _
    $region5: #{dueling_dqn_apply.1} parent=1 // pred_fallthru
      _
    // Predicated region
    $region6: #{dueling_dqn_apply.1} parent=1 // pred_check
      _
    $region7: #{dueling_dqn_apply.1} parent=1 // pred_check_branch
      %20 = sbr.rel (0) target = $region9
    $region8: #{dueling_dqn_apply.1} parent=1 // pred_region
      %22 = vsyncadd [#allocation3], 0
      %s23 = sshll.u32 %s1, 4
      %s24 = int_to_ptr.hbm [resolvable:$true] %s23
      %s25 = sshll.u32 [#allocation2], 4
      %s26 = int_to_ptr.vmem [resolvable:$true] %s25
      %31 = dma.hbm_to_vmem [thread:$0]  %s24, 2048, %s26, [#allocation3], 128, 128, 8
    $region9: #{dueling_dqn_apply.1} parent=1 // pred_fallthru
      _
    // Predicated region
    $region10: #{dueling_dqn_apply.1} parent=1 // pred_check
      _
    $region11: #{dueling_dqn_apply.1} parent=1 // pred_check_branch
      %33 = sbr.rel (0) target = $region13
    $region12: #{dueling_dqn_apply.1} parent=1 // pred_region
      _
    $region13: #{dueling_dqn_apply.1} parent=1 // pred_fallthru
      _
    // Predicated region
    $region14: #{dueling_dqn_apply.1} parent=1 // pred_check
      _
    $region15: #{dueling_dqn_apply.1} parent=1 // pred_check_branch
      %35 = sbr.rel (0) target = $region17
    $region16: #{dueling_dqn_apply.1} parent=1 // pred_region
      %37 = vsyncadd [#allocation5], 0
      %s38 = sshll.u32 %s3, 4
      %s39 = int_to_ptr.hbm [resolvable:$true] %s38
      %s40 = sshll.u32 [#allocation4], 4
      %s41 = int_to_ptr.vmem [resolvable:$true] %s40
      %46 = dma.hbm_to_vmem [thread:$0]  %s39, 2048, %s41, [#allocation5], 128, 128, 8
    $region17: #{dueling_dqn_apply.1} parent=1 // pred_fallthru
      _
    // Predicated region
    $region18: #{dueling_dqn_apply.1} parent=1 // pred_check
      _
    $region19: #{dueling_dqn_apply.1} parent=1 // pred_check_branch
      %48 = sbr.rel (0) target = $region21
    $region20: #{dueling_dqn_apply.1} parent=1 // pred_region
      _
    $region21: #{dueling_dqn_apply.1} parent=1 // pred_fallthru
      _
    // Predicated region
    $region22: #{dueling_dqn_apply.1} parent=1 // pred_check
      _
    $region23: #{dueling_dqn_apply.1} parent=1 // pred_check_branch
      %50 = sbr.rel (0) target = $region25
    $region24: #{dueling_dqn_apply.1} parent=1 // pred_region
      %52 = vsyncadd [#allocation5], 0
      %s53 = sshll.u32 %s5, 4
      %s54 = int_to_ptr.hbm [resolvable:$true] %s53
      %s55 = sshll.u32 [#allocation6], 4
      %s56 = int_to_ptr.vmem [resolvable:$true] %s55
      %61 = dma.hbm_to_vmem [thread:$0]  %s54, 2048, %s56, [#allocation5], 128, 128, 8
    $region25: #{dueling_dqn_apply.1} parent=1 // pred_fallthru
      _
    // Predicated region
    $region26: #{dueling_dqn_apply.1} parent=1 // pred_check
      _
    $region27: #{dueling_dqn_apply.1} parent=1 // pred_check_branch
      %63 = sbr.rel (0) target = $region29
    $region28: #{dueling_dqn_apply.1} parent=1 // pred_region
      _
    $region29: #{dueling_dqn_apply.1} parent=1 // pred_fallthru
      _
    // Predicated region
    $region30: #{dueling_dqn_apply.1} parent=1 // pred_check
      _
    $region31: #{dueling_dqn_apply.1} parent=1 // pred_check_branch
      %65 = sbr.rel (0) target = $region33
    $region32: #{dueling_dqn_apply.1} parent=1 // pred_region
      %67 = vsyncadd [#allocation8], 0
      %s68 = sshll.u32 %s7, 4
      %s69 = int_to_ptr.hbm [resolvable:$true] %s68
      %s70 = sshll.u32 [#allocation7], 4
      %s71 = int_to_ptr.vmem [resolvable:$true] %s70
      %76 = dma.hbm_to_vmem [thread:$0]  %s69, 2048, %s71, [#allocation8], 128, 128, 8
    $region33: #{dueling_dqn_apply.1} parent=1 // pred_fallthru
      _
    // Predicated region
    $region34: #{dueling_dqn_apply.1} parent=1 // pred_check
      _
    $region35: #{dueling_dqn_apply.1} parent=1 // pred_check_branch
      %78 = sbr.rel (0) target = $region37
    $region36: #{dueling_dqn_apply.1} parent=1 // pred_region
      _
    $region37: #{dueling_dqn_apply.1} parent=1 // pred_fallthru
      _
    // Predicated region
    $region38: #{dueling_dqn_apply.1} parent=1 // pred_check
      _
    $region39: #{dueling_dqn_apply.1} parent=1 // pred_check_branch
      %80 = sbr.rel (0) target = $region41
    $region40: #{dueling_dqn_apply.1} parent=1 // pred_region
      %82 = dma.done [#allocation3], 2048
    $region41: #{dueling_dqn_apply.1} parent=1 // pred_fallthru
      _
    // Predicated region
    $region42: #{dueling_dqn_apply.1} parent=1 // pred_check
      _
    $region43: #{dueling_dqn_apply.1} parent=1 // pred_check_branch
      %84 = sbr.rel (0) target = $region45
    $region44: #{dueling_dqn_apply.1} parent=1 // pred_region
      %86 = dma.done [#allocation5], 2048
    $region45: #{dueling_dqn_apply.1} parent=1 // pred_fallthru
      _
    // Predicated region
    $region46: #{dueling_dqn_apply.1} parent=1 // pred_check
      _
    $region47: #{dueling_dqn_apply.1} parent=1 // pred_check_branch
      %88 = sbr.rel (0) target = $region49
    $region48: #{dueling_dqn_apply.1} parent=1 // pred_region
      %90 = dma.done [#allocation5], 2048
    $region49: #{dueling_dqn_apply.1} parent=1 // pred_fallthru
      _
    // Predicated region
    $region50: #{dueling_dqn_apply.1} parent=1 // pred_check
      _
    $region51: #{dueling_dqn_apply.1} parent=1 // pred_check_branch
      %92 = sbr.rel (0) target = $region53
    $region52: #{dueling_dqn_apply.1} parent=1 // pred_region
      %94 = dma.done [#allocation8], 2048
    $region53: #{dueling_dqn_apply.1} parent=1 // pred_fallthru
      _
    %v95 = vld [vmem:[%s0] sm:$0xff]
    %v96 = vld [vmem:[#allocation2] sm:$0xff]
    %v97 = vld [vmem:[#allocation2 + $0x8] sm:$0xff]
    %v98 = vld [vmem:[#allocation2 + $0x10] sm:$0xff]
    %v99 = vld [vmem:[#allocation2 + $0x18] sm:$0xff]
    %v100 = vld [vmem:[#allocation2 + $0x20] sm:$0xff]
    %v101 = vld [vmem:[#allocation2 + $0x28] sm:$0xff]
    %v102 = vld [vmem:[#allocation2 + $0x30] sm:$0xff]
    %v103 = vld [vmem:[#allocation2 + $0x38] sm:$0xff]
    %v104 = vld [vmem:[#allocation2 + $0x40] sm:$0xff]
    %v105 = vld [vmem:[#allocation2 + $0x48] sm:$0xff]
    %v106 = vld [vmem:[#allocation2 + $0x50] sm:$0xff]
    %v107 = vld [vmem:[#allocation2 + $0x58] sm:$0xff]
    %v108 = vld [vmem:[#allocation2 + $0x60] sm:$0xff]
    %v109 = vld [vmem:[#allocation2 + $0x68] sm:$0xff]
    %v110 = vld [vmem:[#allocation2 + $0x70] sm:$0xff]
    %v111 = vld [vmem:[#allocation2 + $0x78] sm:$0xff]
    %v112 = vld [vmem:[%s2] sm:$0x1]
    %v114 = vperm.slane %v112, 0
    %116 = vmatpush.msra.mxu0 %v111
    %117 = vmatpush.msra.mxu0 %v110
    %118 = vmatpush.msra.mxu0 %v109
    %119 = vmatpush.msra.mxu0 %v108
    %120 = vmatpush.msra.mxu0 %v107
    %121 = vmatpush.msra.mxu0 %v106
    %122 = vmatpush.msra.mxu0 %v105
    %123 = vmatpush.msra.mxu0 %v104
    %124 = vmatpush.msra.mxu0 %v103
    %125 = vmatpush.msra.mxu0 %v102
    %126 = vmatpush.msra.mxu0 %v101
    %127 = vmatpush.msra.mxu0 %v100
    %128 = vmatpush.msra.mxu0 %v99
    %129 = vmatpush.msra.mxu0 %v98
    %130 = vmatpush.msra.mxu0 %v97
    %131 = vmatpush.msra.mxu0 %v96
    %132 = vmatmul.f32.gmra.mxu0 %v95
    %v133 = vpop.f32.mrf.mxu0
    %v134 = vadd.f32 %v114, %v133
    %135 = vdwg.mxu0
    %v136 = vmax.f32 %v134, 0.0
    %v137 = vld [vmem:[#allocation4] sm:$0xff]
    %v138 = vld [vmem:[#allocation4 + $0x8] sm:$0xff]
    %v139 = vld [vmem:[#allocation4 + $0x10] sm:$0xff]
    %v140 = vld [vmem:[#allocation4 + $0x18] sm:$0xff]
    %v141 = vld [vmem:[#allocation4 + $0x20] sm:$0xff]
    %v142 = vld [vmem:[#allocation4 + $0x28] sm:$0xff]
    %v143 = vld [vmem:[#allocation4 + $0x30] sm:$0xff]
    %v144 = vld [vmem:[#allocation4 + $0x38] sm:$0xff]
    %v145 = vld [vmem:[#allocation4 + $0x40] sm:$0xff]
    %v146 = vld [vmem:[#allocation4 + $0x48] sm:$0xff]
    %v147 = vld [vmem:[#allocation4 + $0x50] sm:$0xff]
    %v148 = vld [vmem:[#allocation4 + $0x58] sm:$0xff]
    %v149 = vld [vmem:[#allocation4 + $0x60] sm:$0xff]
    %v150 = vld [vmem:[#allocation4 + $0x68] sm:$0xff]
    %v151 = vld [vmem:[#allocation4 + $0x70] sm:$0xff]
    %v152 = vld [vmem:[#allocation4 + $0x78] sm:$0xff]
    %v153 = vld [vmem:[%s4] sm:$0x1]
    %v155 = vperm.slane %v153, 0
    %157 = vmatpush.msra.mxu0 %v152
    %158 = vmatpush.msra.mxu0 %v151
    %159 = vmatpush.msra.mxu0 %v150
    %160 = vmatpush.msra.mxu0 %v149
    %161 = vmatpush.msra.mxu0 %v148
    %162 = vmatpush.msra.mxu0 %v147
    %163 = vmatpush.msra.mxu0 %v146
    %164 = vmatpush.msra.mxu0 %v145
    %165 = vmatpush.msra.mxu0 %v144
    %166 = vmatpush.msra.mxu0 %v143
    %167 = vmatpush.msra.mxu0 %v142
    %168 = vmatpush.msra.mxu0 %v141
    %169 = vmatpush.msra.mxu0 %v140
    %170 = vmatpush.msra.mxu0 %v139
    %171 = vmatpush.msra.mxu0 %v138
    %172 = vmatpush.msra.mxu0 %v137
    %173 = vmatmul.f32.gmra.mxu0 %v136
    %v174 = vpop.f32.mrf.mxu0
    %v175 = vadd.f32 %v155, %v174
    %176 = vdwg.mxu0
    %v177 = vmax.f32 %v175, 0.0
    %v178 = vld [vmem:[#allocation6] sm:$0xff]
    %v179 = vld [vmem:[#allocation6 + $0x8] sm:$0xff]
    %v180 = vld [vmem:[#allocation6 + $0x10] sm:$0xff]
    %v181 = vld [vmem:[#allocation6 + $0x18] sm:$0xff]
    %v182 = vld [vmem:[#allocation6 + $0x20] sm:$0xff]
    %v183 = vld [vmem:[#allocation6 + $0x28] sm:$0xff]
    %v184 = vld [vmem:[#allocation6 + $0x30] sm:$0xff]
    %v185 = vld [vmem:[#allocation6 + $0x38] sm:$0xff]
    %v186 = vld [vmem:[#allocation6 + $0x40] sm:$0xff]
    %v187 = vld [vmem:[#allocation6 + $0x48] sm:$0xff]
    %v188 = vld [vmem:[#allocation6 + $0x50] sm:$0xff]
    %v189 = vld [vmem:[#allocation6 + $0x58] sm:$0xff]
    %v190 = vld [vmem:[#allocation6 + $0x60] sm:$0xff]
    %v191 = vld [vmem:[#allocation6 + $0x68] sm:$0xff]
    %v192 = vld [vmem:[#allocation6 + $0x70] sm:$0xff]
    %v193 = vld [vmem:[#allocation6 + $0x78] sm:$0xff]
    %v194 = vld [vmem:[%s6] sm:$0x1]
    %v196 = vperm.slane %v194, 0
    %198 = vmatpush.msra.mxu0 %v193
    %199 = vmatpush.msra.mxu0 %v192
    %200 = vmatpush.msra.mxu0 %v191
    %201 = vmatpush.msra.mxu0 %v190
    %202 = vmatpush.msra.mxu0 %v189
    %203 = vmatpush.msra.mxu0 %v188
    %204 = vmatpush.msra.mxu0 %v187
    %205 = vmatpush.msra.mxu0 %v186
    %206 = vmatpush.msra.mxu0 %v185
    %207 = vmatpush.msra.mxu0 %v184
    %208 = vmatpush.msra.mxu0 %v183
    %209 = vmatpush.msra.mxu0 %v182
    %210 = vmatpush.msra.mxu0 %v181
    %211 = vmatpush.msra.mxu0 %v180
    %212 = vmatpush.msra.mxu0 %v179
    %213 = vmatpush.msra.mxu0 %v178
    %214 = vmatmul.f32.gmra.mxu0 %v177
    %v215 = vpop.f32.mrf.mxu0
    %v216 = vadd.f32 %v196, %v215
    %217 = vdwg.mxu0
    %v218 = vmax.f32 %v216, 0.0
    %v219 = vld [vmem:[#allocation7] sm:$0xff]
    %v220 = vld [vmem:[#allocation7 + $0x8] sm:$0xff]
    %v221 = vld [vmem:[#allocation7 + $0x10] sm:$0xff]
    %v222 = vld [vmem:[#allocation7 + $0x18] sm:$0xff]
    %v223 = vld [vmem:[#allocation7 + $0x20] sm:$0xff]
    %v224 = vld [vmem:[#allocation7 + $0x28] sm:$0xff]
    %v225 = vld [vmem:[#allocation7 + $0x30] sm:$0xff]
    %v226 = vld [vmem:[#allocation7 + $0x38] sm:$0xff]
    %v227 = vld [vmem:[#allocation7 + $0x40] sm:$0xff]
    %v228 = vld [vmem:[#allocation7 + $0x48] sm:$0xff]
    %v229 = vld [vmem:[#allocation7 + $0x50] sm:$0xff]
    %v230 = vld [vmem:[#allocation7 + $0x58] sm:$0xff]
    %v231 = vld [vmem:[#allocation7 + $0x60] sm:$0xff]
    %v232 = vld [vmem:[#allocation7 + $0x68] sm:$0xff]
    %v233 = vld [vmem:[#allocation7 + $0x70] sm:$0xff]
    %v234 = vld [vmem:[#allocation7 + $0x78] sm:$0xff]
    %v235 = vld [vmem:[%s8] sm:$0x1]
    %v237 = vperm.slane %v235, 0
    %239 = vmatpush.msra.mxu0 %v234
    %240 = vmatpush.msra.mxu0 %v233
    %241 = vmatpush.msra.mxu0 %v232
    %242 = vmatpush.msra.mxu0 %v231
    %243 = vmatpush.msra.mxu0 %v230
    %244 = vmatpush.msra.mxu0 %v229
    %245 = vmatpush.msra.mxu0 %v228
    %246 = vmatpush.msra.mxu0 %v227
    %247 = vmatpush.msra.mxu0 %v226
    %248 = vmatpush.msra.mxu0 %v225
    %249 = vmatpush.msra.mxu0 %v224
    %250 = vmatpush.msra.mxu0 %v223
    %251 = vmatpush.msra.mxu0 %v222
    %252 = vmatpush.msra.mxu0 %v221
    %253 = vmatpush.msra.mxu0 %v220
    %254 = vmatpush.msra.mxu0 %v219
    %255 = vmatmul.f32.gmra.mxu0 %v218
    %v256 = vpop.f32.mrf.mxu0
    %v257 = vadd.f32 %v237, %v256
    %258 = vdwg.mxu0
    %259 = vadd.xlane.f32.xlu0 %v257
    %v260 = vpop.xlane.xlu0 %259
    %v261 = vsub.f32 %v260, %v257
    %v262 = vmul.f32 %v261, 0.25
    %v263 = vsub.f32 %v257, %v262
    %265 = vset.pattern.permute.xlu0 36
    %266 = vperm.xlu0 %265, %v263
    %v267 = vpop.permute.xlu0 %266
    %v269 = vadd.f32 %v257, %v267
    %v270 = vlaneseq
    %v271 = vand.u32 %v270, 127
    %vm272 = vcmp.ge.s32.totalorder %v271, 32
    %vm273 = vcmp.lt.s32.totalorder %v271, 36
    %vm274 = vmand %vm272, %vm273
    %v275 = vsel %vm274, %v269, %v218
    %276 = vst [vmem:[%s9] sm:$0xff] %v275
    // Predicated region
    $region54: #{dueling_dqn_apply.1} parent=1 // pred_check
      _
    $region55: #{dueling_dqn_apply.1} parent=1 // pred_check_branch
      %278 = sbr.rel (0) target = $region57
    $region56: #{dueling_dqn_apply.1} parent=1 // pred_region
      _
    $region57: #{dueling_dqn_apply.1} parent=1 // pred_fallthru
      _
    // Predicated region
    $region58: #{dueling_dqn_apply.1} parent=1 // pred_check
      _
    $region59: #{dueling_dqn_apply.1} parent=1 // pred_check_branch
      %280 = sbr.rel (0) target = $region61
    $region60: #{dueling_dqn_apply.1} parent=1 // pred_region
      _
    $region61: #{dueling_dqn_apply.1} parent=1 // pred_fallthru
      _
    %281 = vsyncpa [#allocation3], 1
    %282 = vsyncpa [#allocation5], 1
    %283 = vsyncpa [#allocation8], 1

</llo_original>
